<compile_context>
chip_gen: v6e
topology: v6e:2x2x1
jax: 0.10.0
libtpu: 0.0.40
codegen_flags: <defaults>
</compile_context>

<pallas_src>
import jax
import jax.numpy as jnp
from jax.experimental import pallas as pl
from jax.experimental.pallas import tpu as pltpu


def _channel_mean_kernel(x_ref, o_ref):
    # x_ref: (B, C, T) block in VMEM; o_ref: (B, T)
    x = x_ref[...].astype(jnp.float32)
    c = x.shape[-2]
    if c <= 8:
        # Unrolled VPU add chain keeps the (tiny) sublane reduction off the XLU.
        acc = x[..., 0, :]
        for i in range(1, c):
            acc = acc + x[..., i, :]
    else:
        acc = jnp.sum(x, axis=-2)
    o_ref[...] = (acc * (1.0 / c)).astype(o_ref.dtype)


def p_model_forward(x, *, vmem_budget_bytes=16 * 1024 * 1024):
    """x: (N, C, W, H) -> (N, 1, W, H), mean over the channel dimension."""
    n, c, w, h = x.shape
    wh = w * h
    x3 = x.reshape(n, c, wh)
    itemsize = jnp.dtype(x.dtype).itemsize

    # ---- Small path: whole problem in a single grid step (fold N). ----
    total_in_bytes = n * c * wh * itemsize
    if 2 * total_in_bytes <= vmem_budget_bytes:
        out2 = pl.pallas_call(
            _channel_mean_kernel,
            out_shape=jax.ShapeDtypeStruct((n, wh), x.dtype),
            grid_spec=pltpu.PrefetchScalarGridSpec(
                num_scalar_prefetch=0,
                grid=(1,),
                in_specs=[pl.BlockSpec((n, c, wh), lambda i: (0, 0, 0))],
                out_specs=pl.BlockSpec((n, wh), lambda i: (0, 0)),
            ),
            compiler_params=pltpu.CompilerParams(
                dimension_semantics=("parallel",),
            ),
        )(x3)
        return out2.reshape(n, 1, w, h)

    # ---- Tiled path: 2-D parallel grid over (batch, spatial tiles). ----
    # Largest multiple of 128 that divides wh and fits the double-buffered
    # VMEM budget: 2 * (C*TILE + TILE) * itemsize <= budget, capped at 8192.
    max_tile = vmem_budget_bytes // (2 * (c + 1) * itemsize)
    max_tile = max(128, min(max_tile, 8192))
    tile_wh = None
    t = (max_tile // 128) * 128
    while t >= 128:
        if wh % t == 0:
            tile_wh = t
            break
        t -= 128
    if tile_wh is None:
        # wh not a multiple of 128: fall back to the full spatial extent
        # (block dim equal to the full array dim is always legal).
        tile_wh = wh

    grid = (n, wh // tile_wh)
    out2 = pl.pallas_call(
        _channel_mean_kernel,
        out_shape=jax.ShapeDtypeStruct((n, wh), x.dtype),
        grid_spec=pltpu.PrefetchScalarGridSpec(
            num_scalar_prefetch=0,
            grid=grid,
            in_specs=[pl.BlockSpec((1, c, tile_wh), lambda i, j: (i, 0, j))],
            out_specs=pl.BlockSpec((1, tile_wh), lambda i, j: (i, j)),
        ),
        compiler_params=pltpu.CompilerParams(
            dimension_semantics=("parallel", "parallel"),
        ),
    )(x3)
    return out2.reshape(n, 1, w, h)


if __name__ == "__main__":
    key = jax.random.PRNGKey(0)
    N, C, W, H = 2, 4, 16, 16
    x = jax.random.normal(key, (N, C, W, H), dtype=jnp.float32)

    out = jax.block_until_ready(p_model_forward(x))

    # Reference check against plain JAX (mean over channel dim).
    ref = jnp.mean(x, axis=1, keepdims=True)
    assert out.shape == (N, 1, W, H), out.shape
    assert jnp.allclose(out, ref, atol=1e-6, rtol=1e-6), "mismatch vs reference"

    # Also exercise the tiled (large-shape) path once for coverage.
    x_big = jax.random.normal(jax.random.PRNGKey(1), (2, 8, 64, 128), jnp.float32)
    out_big = jax.block_until_ready(
        p_model_forward(x_big, vmem_budget_bytes=64 * 1024)
    )
    ref_big = jnp.mean(x_big, axis=1, keepdims=True)
    assert jnp.allclose(out_big, ref_big, atol=1e-6, rtol=1e-6), "tiled path mismatch"

    print("KERNEL_OK")
</pallas_src>

<mosaic_0001>
module attributes {stable_mosaic.version = 11 : i64} {
  func.func @_channel_mean_kernel(%arg0: i32, %arg1: memref<2x4x256xf32, #tpu.memory_space<vmem>>, %arg2: memref<2x256xf32, #tpu.memory_space<vmem>>) attributes {dimension_semantics = [#tpu.dimension_semantics<parallel>], iteration_bounds = array<i64: 1>, scalar_prefetch = 0 : i64, scratch_operands = 0 : i64, tpu.core_type = #tpu.core_type<tc>, window_params = [{pipeline_mode = #tpu.pipeline_mode<synchronous>, transform_indices = @transform_0, window_bounds = array<i64: 2, 4, 256>}, {pipeline_mode = #tpu.pipeline_mode<synchronous>, transform_indices = @transform_1, window_bounds = array<i64: 2, 256>}]} {
    %c0 = arith.constant 0 : index
    %c0_0 = arith.constant 0 : index
    %c0_1 = arith.constant 0 : index
    %0 = vector.load %arg1[%c0, %c0_0, %c0_1] : memref<2x4x256xf32, #tpu.memory_space<vmem>>, vector<2x4x256xf32>
    %1 = vector.extract_strided_slice %0 {offsets = [0, 0, 0], sizes = [2, 1, 256], strides = [1, 1, 1]} : vector<2x4x256xf32> to vector<2x1x256xf32>
    %2 = vector.shape_cast %1 : vector<2x1x256xf32> to vector<2x256xf32>
    %3 = vector.extract_strided_slice %0 {offsets = [0, 1, 0], sizes = [2, 1, 256], strides = [1, 1, 1]} : vector<2x4x256xf32> to vector<2x1x256xf32>
    %4 = vector.shape_cast %3 : vector<2x1x256xf32> to vector<2x256xf32>
    %5 = arith.addf %2, %4 : vector<2x256xf32>
    %6 = vector.extract_strided_slice %0 {offsets = [0, 2, 0], sizes = [2, 1, 256], strides = [1, 1, 1]} : vector<2x4x256xf32> to vector<2x1x256xf32>
    %7 = vector.shape_cast %6 : vector<2x1x256xf32> to vector<2x256xf32>
    %8 = arith.addf %5, %7 : vector<2x256xf32>
    %9 = vector.extract_strided_slice %0 {offsets = [0, 3, 0], sizes = [2, 1, 256], strides = [1, 1, 1]} : vector<2x4x256xf32> to vector<2x1x256xf32>
    %10 = vector.shape_cast %9 : vector<2x1x256xf32> to vector<2x256xf32>
    %11 = arith.addf %8, %10 : vector<2x256xf32>
    %cst = arith.constant 2.500000e-01 : f32
    %12 = vector.broadcast %cst : f32 to vector<2x256xf32>
    %13 = arith.mulf %11, %12 : vector<2x256xf32>
    %c0_2 = arith.constant 0 : index
    %c0_3 = arith.constant 0 : index
    %14 = vector.load %arg2[%c0_2, %c0_3] : memref<2x256xf32, #tpu.memory_space<vmem>>, vector<2x256xf32>
    tpu.vector_store %arg2[%c0_2, %c0_3], %13 {strides = array<i32>} : memref<2x256xf32, #tpu.memory_space<vmem>>, vector<2x256xf32>,
    return
  }
  func.func @transform_0(%arg0: i32) -> (i32, i32, i32) {
    %c0_i32 = arith.constant 0 : i32
    %c0_i32_0 = arith.constant 0 : i32
    %c0_i32_1 = arith.constant 0 : i32
    %c0_i32_2 = arith.constant 0 : i32
    return %c0_i32, %c0_i32_0, %c0_i32_1 : i32, i32, i32
  }
  func.func @transform_1(%arg0: i32) -> (i32, i32) {
    %c0_i32 = arith.constant 0 : i32
    %c0_i32_0 = arith.constant 0 : i32
    %c0_i32_1 = arith.constant 0 : i32
    return %c0_i32, %c0_i32_0 : i32, i32
  }
}

</mosaic_0001>

<llo_original>
// kernel: tpu_custom_call.1
$region0: #{tpu_custom_call.1}
  #allocation0 [shape = 'u32[]', space=smem, size = 0x4, offset = 0x4, fixed_abs, tag = 'smem constant byte address 0x4 - core index']
  #allocation1 [shape = 'u32[144,128]{1,0:T(1,128)}', space=vmem, size = 0x12000, scoped, tag = 'internal scratch']
  %s0 = inlined_call_operand.hbm [shape: f32[2,4,256], index: 0, kind: input, shape index: {}]
  %s1 = inlined_call_operand.hbm [shape: f32[2,256], index: 1, kind: output, shape index: {}]
  %s2 = sld [smem:[#allocation0]]
  $region18: #{tpu_custom_call.1} parent=0
    _
  %s4 = ssub.s32 1, %s2
  %s5 = scalar_select 0, %s4, %s2
  $region1: #{tpu_custom_call.1} parent=0
    #allocation2 [shape = 'u8[8192]{0}', space=vmem, size = 0x2000, scoped, tag = 'input window, operand 0, single buffered']
    #allocation3 [shape = 's32[1]{0}', space=sflag, size = 0x4, scoped, tag = 'scoped memory for tpu_custom_call.1']
    #allocation4 [shape = 's32[1]{0}', space=sflag, size = 0x4, scoped, tag = 'scoped memory for tpu_custom_call.1']
    #allocation5 [shape = 'u8[2048]{0}', space=vmem, size = 0x800, scoped, tag = 'output window, operand 0, single buffered']
    %6 = vsyncpa [#allocation3], 0
    %7 = vsyncpa [#allocation4], 0
    // Predicated region
    $region2: #{tpu_custom_call.1} parent=1 // pred_check
      _
    $region3: #{tpu_custom_call.1} parent=1 // pred_check_branch
      %9 = sbr.rel (0) target = $region5
    $region4: #{tpu_custom_call.1} parent=1 // pred_region
      %s11 = ssub.s32 256, 256
      %12 = vsyncadd [#allocation3], %s11
      %s13 = sshll.u32 [#allocation2], 4
      %s14 = int_to_ptr.vmem [resolvable:$true] %s13
      %19 = dma.hbm_to_vmem [thread:$0]  %s0, 256, %s14, [#allocation3], 128, 128, 8
    $region5: #{tpu_custom_call.1} parent=1 // pred_fallthru
      _
    // Predicated region
    $region6: #{tpu_custom_call.1} parent=1 // pred_check
      _
    $region7: #{tpu_custom_call.1} parent=1 // pred_check_branch
      %21 = sbr.rel (0) target = $region9
    $region8: #{tpu_custom_call.1} parent=1 // pred_region
      %22 = dma.done [#allocation3], 256
    $region9: #{tpu_custom_call.1} parent=1 // pred_fallthru
      _
    %v23 = vld [vmem:[#allocation2] sm:$0xff]
    %v24 = vld [vmem:[#allocation2 + $0x8] sm:$0xff]
    %v27 = vrot.slane %v23, 5
    %v28 = vrot.slane %v27, 4
    %v29 = vrot.slane %v24, 5
    %v30 = vrot.slane %v29, 4
    %v33 = vadd.f32 %v23, %v28
    %v34 = vadd.f32 %v24, %v30
    %v35 = vrot.slane %v23, 6
    %v36 = vrot.slane %v35, 4
    %v37 = vrot.slane %v24, 6
    %v38 = vrot.slane %v37, 4
    %v41 = vadd.f32 %v33, %v36
    %v42 = vadd.f32 %v34, %v38
    %v43 = vrot.slane %v23, 7
    %v44 = vrot.slane %v43, 4
    %v45 = vrot.slane %v24, 7
    %v46 = vrot.slane %v45, 4
    %v49 = vadd.f32 %v41, %v44
    %v50 = vadd.f32 %v42, %v46
    %v51 = vmul.f32 %v49, 0.25
    %v52 = vmul.f32 %v50, 0.25
    %v56 = vunpack.c.l.s4 1983009808
    %v57 = vunpack.c.0.s8 %v56
    %v58 = vlaneseq
    %v59 = vshrl.u32 %v58, 7
    %v60 = vsub.s32 %v57, %v59
    %v61 = vrot.slane %v51, %v60
    %v63 = vunpack.c.l.s4 1983009808
    %v64 = vunpack.c.0.s8 %v63
    %v65 = vlaneseq
    %v66 = vshrl.u32 %v65, 7
    %v67 = vsub.s32 %v64, %v66
    %v68 = vrot.slane %v52, %v67
    %vm69 = vcmask 1044484
    %v70 = vsel %vm69, %v61, %v61
    %vm71 = vcmask 1046534
    %v72 = vsel %vm71, %v61, %v70
    %v73 = vrot.slane %v68, 7
    %vm74 = vcmask 1041409
    %v75 = vsel %vm74, %v73, %v72
    %vm76 = vcmask 1043459
    %v77 = vsel %vm76, %v73, %v75
    %vm78 = vcmask 1045509
    %v79 = vsel %vm78, %v73, %v77
    %vm80 = vcmask 1047559
    %v81 = vsel %vm80, %v73, %v79
    %83 = vst [vmem:[#allocation5] sm:$0xf] %v81
    // Predicated region
    $region10: #{tpu_custom_call.1} parent=1 // pred_check
      _
    $region11: #{tpu_custom_call.1} parent=1 // pred_check_branch
      %85 = sbr.rel (0) target = $region13
    $region12: #{tpu_custom_call.1} parent=1 // pred_region
      %s87 = ssub.s32 64, 64
      %88 = vsyncadd [#allocation4], %s87
      %s90 = sshll.u32 [#allocation5], 4
      %s91 = int_to_ptr.vmem [resolvable:$true] %s90
      %93 = dma.vmem_to_hbm [thread:$0]  %s91, 64, %s1, [#allocation4]
    $region13: #{tpu_custom_call.1} parent=1 // pred_fallthru
      _
    // Predicated region
    $region14: #{tpu_custom_call.1} parent=1 // pred_check
      _
    $region15: #{tpu_custom_call.1} parent=1 // pred_check_branch
      %95 = sbr.rel (0) target = $region17
    $region16: #{tpu_custom_call.1} parent=1 // pred_region
      %96 = dma.done [#allocation4], 64
    $region17: #{tpu_custom_call.1} parent=1 // pred_fallthru
      _
    %97 = vsyncpa [#allocation3], 1
    %98 = vsyncpa [#allocation4], 1

</llo_original>
